<compile_context>
chip_gen: v6e
topology: v6e:2x2x1
jax: 0.10.0
libtpu: 0.0.40
codegen_flags: <defaults>
</compile_context>

<pallas_src>
import jax
import jax.numpy as jnp
from jax.experimental import pallas as pl
from jax.experimental.pallas import tpu as pltpu

EPS = 1e-5  # matches self.eps = torch.tensor(1e-05)


def _stats_kernel(x_ref, sum_ref, sumsq_ref):
    # x_ref:   (1, C, TL)  one batch row, all channels, TL lanes
    # outputs: (1, 1, C, 1) per-tile partial sums (f32)
    x = x_ref[0].astype(jnp.float32)                 # (C, TL)
    s1 = jnp.sum(x, axis=-1, keepdims=True)          # (C, 1)
    s2 = jnp.sum(x * x, axis=-1, keepdims=True)      # (C, 1)
    sum_ref[...] = s1[None, None]                    # (1, 1, C, 1)
    sumsq_ref[...] = s2[None, None]


def _norm_kernel(x_ref, scale_ref, bias_ref, o_ref):
    # x_ref: (1, C, TL); scale/bias: (C, 1) f32 (precomputed per channel)
    x = x_ref[...].astype(jnp.float32)               # (1, C, TL)
    s = scale_ref[...][None]                         # (1, C, 1)
    b = bias_ref[...][None]                          # (1, C, 1)
    o_ref[...] = (x * s + b).astype(o_ref.dtype)     # single cast at the store


def _pick_tile(L, max_tl=2048):
    """Largest multiple of 128 that divides L and is <= max_tl; else full L."""
    if L % 128 != 0:
        return L  # fall back: whole axis as one (full-dim) block
    best = 128
    for t in range(128, min(max_tl, L) + 1, 128):
        if L % t == 0:
            best = t
    return best


def quaternion_batch_norm_2d(x, gamma, beta, *, eps=EPS, max_lane_tile=2048):
    """x: (N, C, H, W) NCHW; gamma: (1, C//4, 1, 1); beta: (1, C, 1, 1)."""
    N, C, H, W = x.shape
    assert C % 4 == 0, "channel count must be divisible by 4 (quaternion)"
    Cq = C // 4
    L = H * W
    TL = _pick_tile(L, max_lane_tile)
    nL = L // TL

    x3 = x.reshape(N, C, L)  # free reshape, no HBM transpose

    # ---------------- pass 1: per-tile partial sums ----------------
    sums, sumsqs = pl.pallas_call(
        _stats_kernel,
        out_shape=(jax.ShapeDtypeStruct((N, nL, C, 1), jnp.float32),
                   jax.ShapeDtypeStruct((N, nL, C, 1), jnp.float32)),
        grid=(N, nL),
        in_specs=[pl.BlockSpec((1, C, TL), lambda n, l: (n, 0, l))],
        out_specs=(pl.BlockSpec((1, 1, C, 1), lambda n, l: (n, l, 0, 0)),
                   pl.BlockSpec((1, 1, C, 1), lambda n, l: (n, l, 0, 0))),
        compiler_params=pltpu.CompilerParams(
            dimension_semantics=("parallel", "parallel")),
    )(x3)

    # ---------------- tiny cross-tile combine (plain JAX) ----------------
    per_ch_sum = sums.sum(axis=(0, 1)).reshape(C)        # (C,)
    per_ch_sumsq = sumsqs.sum(axis=(0, 1)).reshape(C)    # (C,)
    cnt = jnp.float32(N * Cq * L)                        # elements per component
    mu_comp = per_ch_sum.reshape(4, Cq).sum(axis=1) / cnt       # (4,) per-component mean
    ex2_comp = per_ch_sumsq.reshape(4, Cq).sum(axis=1) / cnt    # (4,) per-component E[x^2]
    quat_var = jnp.sum(ex2_comp - mu_comp * mu_comp)            # Var(r)+Var(i)+Var(j)+Var(k)
    inv = jax.lax.rsqrt(quat_var + jnp.float32(eps))            # 1/sqrt(var+eps)

    gamma_ch = jnp.tile(gamma.reshape(Cq).astype(jnp.float32), 4)   # gamma[c % Cq]
    beta_ch = beta.reshape(C).astype(jnp.float32)
    mu_ch = jnp.repeat(mu_comp, Cq)                                  # mu_comp[c // Cq]
    scale = (gamma_ch * inv).reshape(C, 1)                           # f32 (C, 1)
    bias = (beta_ch - gamma_ch * inv * mu_ch).reshape(C, 1)          # f32 (C, 1)

    # ---------------- pass 2: streaming per-channel FMA ----------------
    out3 = pl.pallas_call(
        _norm_kernel,
        out_shape=jax.ShapeDtypeStruct((N, C, L), x.dtype),
        grid=(N, nL),
        in_specs=[pl.BlockSpec((1, C, TL), lambda n, l: (n, 0, l)),
                  pl.BlockSpec((C, 1), lambda n, l: (0, 0)),
                  pl.BlockSpec((C, 1), lambda n, l: (0, 0))],
        out_specs=pl.BlockSpec((1, C, TL), lambda n, l: (n, 0, l)),
        compiler_params=pltpu.CompilerParams(
            dimension_semantics=("parallel", "parallel")),
    )(x3, scale, bias)

    return out3.reshape(N, C, H, W)


def _reference(x, gamma, beta):
    # Pure-JAX transcription of the PyTorch forward (for a correctness check).
    r, i, j, k = jnp.split(x, 4, axis=1)
    dr, di, dj, dk = r - r.mean(), i - i.mean(), j - j.mean(), k - k.mean()
    var = jnp.mean(dr**2 + di**2 + dj**2 + dk**2)
    den = jnp.sqrt(var + EPS)
    b0, b1, b2, b3 = jnp.split(beta, 4, axis=1)
    return jnp.concatenate(
        [gamma * (dr / den) + b0,
         gamma * (di / den) + b1,
         gamma * (dj / den) + b2,
         gamma * (dk / den) + b3],
        axis=1,
    )


if __name__ == "__main__":
    key = jax.random.PRNGKey(0)
    kx, kg, kb = jax.random.split(key, 3)

    N, C, H, W = 2, 8, 16, 16          # num_features = 8 -> Cq = 2
    Cq = C // 4

    x = jax.random.normal(kx, (N, C, H, W), dtype=jnp.float32)
    gamma = jnp.full((1, Cq, 1, 1), 1.0, dtype=jnp.float32) + \
        0.1 * jax.random.normal(kg, (1, Cq, 1, 1), dtype=jnp.float32)
    beta = 0.1 * jax.random.normal(kb, (1, C, 1, 1), dtype=jnp.float32)

    out = quaternion_batch_norm_2d(x, gamma, beta)
    out = jax.block_until_ready(out)

    ref = _reference(x, gamma, beta)
    assert out.shape == x.shape and out.dtype == x.dtype
    assert jnp.allclose(out, ref, atol=1e-5, rtol=1e-5), "mismatch vs reference"

    print("KERNEL_OK")
</pallas_src>

<mosaic_0001>
module attributes {stable_mosaic.version = 11 : i64} {
  func.func @_stats_kernel(%arg0: i32, %arg1: i32, %arg2: memref<1x8x256xf32, #tpu.memory_space<vmem>>, %arg3: memref<1x1x8x1xf32, #tpu.memory_space<vmem>>, %arg4: memref<1x1x8x1xf32, #tpu.memory_space<vmem>>) attributes {dimension_semantics = [#tpu.dimension_semantics<parallel>, #tpu.dimension_semantics<parallel>], iteration_bounds = array<i64: 2, 1>, scalar_prefetch = 0 : i64, scratch_operands = 0 : i64, tpu.core_type = #tpu.core_type<tc>, window_params = [{transform_indices = @transform_0, window_bounds = array<i64: 1, 8, 256>}, {transform_indices = @transform_1, window_bounds = array<i64: 1, 1, 8, 1>}, {transform_indices = @transform_2, window_bounds = array<i64: 1, 1, 8, 1>}]} {
    %c0 = arith.constant 0 : index
    %c0_0 = arith.constant 0 : index
    %c0_1 = arith.constant 0 : index
    %0 = vector.load %arg2[%c0, %c0_0, %c0_1] : memref<1x8x256xf32, #tpu.memory_space<vmem>>, vector<1x8x256xf32>
    %1 = vector.shape_cast %0 : vector<1x8x256xf32> to vector<8x256xf32>
    %cst = arith.constant dense<0.000000e+00> : vector<8xf32>
    %2 = vector.multi_reduction <add>, %1, %cst [1] : vector<8x256xf32> to vector<8xf32>
    %3 = vector.shape_cast %2 : vector<8xf32> to vector<8x1xf32>
    %4 = arith.mulf %1, %1 : vector<8x256xf32>
    %cst_2 = arith.constant dense<0.000000e+00> : vector<8xf32>
    %5 = vector.multi_reduction <add>, %4, %cst_2 [1] : vector<8x256xf32> to vector<8xf32>
    %6 = vector.shape_cast %5 : vector<8xf32> to vector<8x1xf32>
    %7 = vector.shape_cast %3 : vector<8x1xf32> to vector<1x1x8x1xf32>
    %c0_3 = arith.constant 0 : index
    %c0_4 = arith.constant 0 : index
    %c0_5 = arith.constant 0 : index
    %c0_6 = arith.constant 0 : index
    %8 = vector.load %arg3[%c0_3, %c0_4, %c0_5, %c0_6] : memref<1x1x8x1xf32, #tpu.memory_space<vmem>>, vector<1x1x8x1xf32>
    tpu.vector_store %arg3[%c0_3, %c0_4, %c0_5, %c0_6], %7 {strides = array<i32>} : memref<1x1x8x1xf32, #tpu.memory_space<vmem>>, vector<1x1x8x1xf32>,
    %9 = vector.shape_cast %6 : vector<8x1xf32> to vector<1x1x8x1xf32>
    %c0_7 = arith.constant 0 : index
    %c0_8 = arith.constant 0 : index
    %c0_9 = arith.constant 0 : index
    %c0_10 = arith.constant 0 : index
    %10 = vector.load %arg4[%c0_7, %c0_8, %c0_9, %c0_10] : memref<1x1x8x1xf32, #tpu.memory_space<vmem>>, vector<1x1x8x1xf32>
    tpu.vector_store %arg4[%c0_7, %c0_8, %c0_9, %c0_10], %9 {strides = array<i32>} : memref<1x1x8x1xf32, #tpu.memory_space<vmem>>, vector<1x1x8x1xf32>,
    return
  }
  func.func @transform_0(%arg0: i32, %arg1: i32) -> (i32, i32, i32) {
    %c0_i32 = arith.constant 0 : i32
    %c0_i32_0 = arith.constant 0 : i32
    return %arg0, %c0_i32, %arg1 : i32, i32, i32
  }
  func.func @transform_1(%arg0: i32, %arg1: i32) -> (i32, i32, i32, i32) {
    %c0_i32 = arith.constant 0 : i32
    %c0_i32_0 = arith.constant 0 : i32
    %c0_i32_1 = arith.constant 0 : i32
    return %arg0, %arg1, %c0_i32, %c0_i32_0 : i32, i32, i32, i32
  }
  func.func @transform_2(%arg0: i32, %arg1: i32) -> (i32, i32, i32, i32) {
    %c0_i32 = arith.constant 0 : i32
    %c0_i32_0 = arith.constant 0 : i32
    %c0_i32_1 = arith.constant 0 : i32
    return %arg0, %arg1, %c0_i32, %c0_i32_0 : i32, i32, i32, i32
  }
}

</mosaic_0001>

<llo_original>
// kernel: tpu_custom_call.1
$region0: #{tpu_custom_call.1}
  #allocation0 [shape = 'u32[]', space=smem, size = 0x4, offset = 0x4, fixed_abs, tag = 'smem constant byte address 0x4 - core index']
  #allocation1 [shape = 'u32[144,128]{1,0:T(1,128)}', space=vmem, size = 0x12000, scoped, tag = 'internal scratch']
  %s0 = inlined_call_operand.hbm [shape: f32[2,8,256], index: 0, kind: input, shape index: {}]
  %s1 = inlined_call_operand.vmem [shape: f32[2,1,8,1], index: 1, kind: output, shape index: {0}]
  %s2 = inlined_call_operand.vmem [shape: f32[2,1,8,1], index: 2, kind: output, shape index: {1}]
  %3 = xla_tuple %s1, %s2
  %s4 = sld [smem:[#allocation0]]
  $region49: #{tpu_custom_call.1} parent=0
    _
  %s6 = ssub.s32 1, %s4
  %s7 = scalar_select 0, %s6, %s4
  $region1: #{tpu_custom_call.1} parent=0
    #allocation2 [shape = 'u8[16384]{0}', space=vmem, size = 0x4000, scoped, tag = 'input window, operand 0']
    #allocation3 [shape = 's32[2]{0}', space=sflag, size = 0x8, scoped, tag = 'scoped memory for tpu_custom_call.1']
    %8 = vsyncpa [#allocation3], 0
    %s9 = scalar_lea.sflag [#allocation3], 1
    %10 = vsyncpa %s9, 0
    loop: start=0, step=1, limit=4
    $region2: #{tpu_custom_call.1} parent=1 // loop_pre_header
      _
    $region3: #{tpu_custom_call.1} parent=1 // loop_header
      %s12 = sphi 0, %s16
      %p13 = scmp.ge.s32.totalorder %s12, 4
      %s19 = sphi 0, %s31
      %s20 = sphi 0, %s27
      %s21 = sphi 0, %s19
      %s22 = sphi 0, %s20
      %s23 = sphi 0, %s21
      %s24 = sphi 0, %s22
      %s36 = sphi 0, %s38
      %s39 = sphi 0, %s36
      %s40 = sphi 0, %s39
      %s56 = sphi 0, %s40
      %s64 = sphi 0, %s66
      %s67 = sphi 0, %s64
      %s68 = sphi 0, %s67
      %s84 = sphi 0, %s68
      %s92 = sphi 0, %s94
      %s95 = sphi 0, %s92
      %s96 = sphi 0, %s95
      %s112 = sphi 0, %s96
    $region4: #{tpu_custom_call.1} parent=1 // loop_header_branch
      %15 = sbr.rel (%p13) target = $region8
    $region5: #{tpu_custom_call.1} parent=1 // loop_body
      %s17 = ssub.s32 %s12, 1
      %s18 = ssub.s32 %s12, 2
      %s25 = sadd.s32 1, %s20
      %p26 = scmp.ge.s32.totalorder %s25, 1
      %s27 = scalar_select %p26, 0, %s25
      %s28 = sadd.s32 1, %s19
      %s29 = scalar_select %p26, %s28, %s19
      %p30 = scmp.ge.s32.totalorder %s29, 2
      %s31 = scalar_select %p30, 0, %s29
      %s32 = ssub.s32 %s19, %s31
      %s33 = ssub.s32 %s20, %s27
      %s34 = sor.u32 %s32, %s33
      %p35 = scmp.eq.s32.totalorder %s34, 0
      %s37 = sadd.s32 %s36, 1
      %s38 = scalar_select %p35, %s36, %s37
      %p41 = pneg %p35
      %p42 = scmp.eq.s32.totalorder %s12, 1
      %p43 = por %p41, %p42
      %p44 = scmp.ne.s32.totalorder %s36, %s39
      %p45 = scmp.eq.s32.totalorder %s12, 0
      %p46 = por %p44, %p45
      %p47 = scmp.ne.s32.totalorder %s36, %s39
      %p48 = scmp.eq.s32.totalorder %s17, 1
      %p49 = por %p47, %p48
      %p50 = scmp.ne.s32.totalorder %s39, %s40
      %p51 = scmp.eq.s32.totalorder %s17, 0
      %p52 = por %p50, %p51
      %p53 = scmp.ne.s32.totalorder %s39, %s40
      %p54 = scmp.eq.s32.totalorder %s18, 1
      %p55 = por %p53, %p54
      %p57 = scmp.ne.s32.totalorder %s40, %s56
      %p58 = scmp.eq.s32.totalorder %s18, 0
      %p59 = por %p57, %p58
      %s60 = ssub.s32 %s19, %s31
      %s61 = ssub.s32 %s20, %s27
      %s62 = sor.u32 %s60, %s61
      %p63 = scmp.eq.s32.totalorder %s62, 0
      %s65 = sadd.s32 %s64, 1
      %s66 = scalar_select %p63, %s64, %s65
      %p69 = pneg %p63
      %p70 = scmp.eq.s32.totalorder %s12, 1
      %p71 = por %p69, %p70
      %p72 = scmp.ne.s32.totalorder %s64, %s67
      %p73 = scmp.eq.s32.totalorder %s12, 0
      %p74 = por %p72, %p73
      %p75 = scmp.ne.s32.totalorder %s64, %s67
      %p76 = scmp.eq.s32.totalorder %s17, 1
      %p77 = por %p75, %p76
      %p78 = scmp.ne.s32.totalorder %s67, %s68
      %p79 = scmp.eq.s32.totalorder %s17, 0
      %p80 = por %p78, %p79
      %p81 = scmp.ne.s32.totalorder %s67, %s68
      %p82 = scmp.eq.s32.totalorder %s18, 1
      %p83 = por %p81, %p82
      %p85 = scmp.ne.s32.totalorder %s68, %s84
      %p86 = scmp.eq.s32.totalorder %s18, 0
      %p87 = por %p85, %p86
      %s88 = ssub.s32 %s19, %s31
      %s89 = ssub.s32 %s20, %s27
      %s90 = sor.u32 %s88, %s89
      %p91 = scmp.eq.s32.totalorder %s90, 0
      %s93 = sadd.s32 %s92, 1
      %s94 = scalar_select %p91, %s92, %s93
      %p97 = pneg %p91
      %p98 = scmp.eq.s32.totalorder %s12, 1
      %p99 = por %p97, %p98
      %p100 = scmp.ne.s32.totalorder %s92, %s95
      %p101 = scmp.eq.s32.totalorder %s12, 0
      %p102 = por %p100, %p101
      %p103 = scmp.ne.s32.totalorder %s92, %s95
      %p104 = scmp.eq.s32.totalorder %s17, 1
      %p105 = por %p103, %p104
      %p106 = scmp.ne.s32.totalorder %s95, %s96
      %p107 = scmp.eq.s32.totalorder %s17, 0
      %p108 = por %p106, %p107
      %p109 = scmp.ne.s32.totalorder %s95, %s96
      %p110 = scmp.eq.s32.totalorder %s18, 1
      %p111 = por %p109, %p110
      %p113 = scmp.ne.s32.totalorder %s96, %s112
      %p114 = scmp.eq.s32.totalorder %s18, 0
      %p115 = por %p113, %p114
      %p116 = scmp.le.s32.totalorder 1, %s12
      %p117 = scmp.lt.s32.totalorder %s12, 3
      %p118 = pnand %p116, %p117
      %p119 = pneg %p118
      // Predicated region
      $region9: #{tpu_custom_call.1} parent=5 // pred_check
        _
      $region10: #{tpu_custom_call.1} parent=5 // pred_check_branch
        %121 = sbr.rel (%p118) target = $region12
      $region11: #{tpu_custom_call.1} parent=5 // pred_region
        %s122 = ssub.s32 %s12, 1
      $region12: #{tpu_custom_call.1} parent=5 // pred_fallthru
        _
      %p123 = scmp.lt.s32.totalorder %s12, 2
      // Predicated region
      $region13: #{tpu_custom_call.1} parent=5 // pred_check
        %p124 = pneg %p123
      $region14: #{tpu_custom_call.1} parent=5 // pred_check_branch
        %126 = sbr.rel (%p124) target = $region16
      $region15: #{tpu_custom_call.1} parent=5 // pred_region
        // Predicated region
        $region17: #{tpu_custom_call.1} parent=15 // pred_check
          %p127 = pneg %p46
        $region18: #{tpu_custom_call.1} parent=15 // pred_check_branch
          %129 = sbr.rel (%p127) target = $region20
        $region19: #{tpu_custom_call.1} parent=15 // pred_region
          %s130 = sand.u32 %s36, 1
          %s131 = scalar_lea.sflag [#allocation3], %s130
          %s132 = sand.u32 %s36, 1
          %s133 = smul.addr %s132, 16
          %s134 = scalar_lea.vmem [#allocation2], %s133
          %s135 = smul.u32 2, %s20
          %s137 = ssub.s32 256, 256
          %138 = vsyncadd %s131, %s137
          %s139 = smul.addr %s19, 2
          %s140 = sadd.s32 %s135, %s139
          %s141 = smul.addr %s140, 128
          %s142 = scalar_lea.hbm %s0, %s141
          %s144 = sshll.u32 %s134, 4
          %s145 = int_to_ptr.vmem [resolvable:$true] %s144
          %147 = dma.hbm_to_vmem [thread:$0]  %s142, 256, %s145, %s131
        $region20: #{tpu_custom_call.1} parent=15 // pred_fallthru
          _
      $region16: #{tpu_custom_call.1} parent=5 // pred_fallthru
        _
      %p148 = scmp.le.s32.totalorder 1, %s12
      %p149 = scmp.lt.s32.totalorder %s12, 3
      %p150 = pnand %p148, %p149
      %p151 = pneg %p150
      // Predicated region
      $region21: #{tpu_custom_call.1} parent=5 // pred_check
        _
      $region22: #{tpu_custom_call.1} parent=5 // pred_check_branch
        %153 = sbr.rel (%p150) target = $region24
      $region23: #{tpu_custom_call.1} parent=5 // pred_region
        %s154 = ssub.s32 %s12, 1
        %s155 = sand.u32 %s39, 1
        %s156 = scalar_lea.sflag [#allocation3], %s155
        %s157 = sand.u32 %s39, 1
        %s158 = smul.addr %s157, 16
        %s159 = scalar_lea.vmem [#allocation2], %s158
        // Predicated region
        $region25: #{tpu_custom_call.1} parent=23 // pred_check
          %p160 = pneg %p52
        $region26: #{tpu_custom_call.1} parent=23 // pred_check_branch
          %162 = sbr.rel (%p160) target = $region28
        $region27: #{tpu_custom_call.1} parent=23 // pred_region
          %163 = dma.done %s156, 256
        $region28: #{tpu_custom_call.1} parent=23 // pred_fallthru
          _
        %s164 = sand.u32 %s39, 1
        %s165 = scalar_lea.sflag [#allocation3], %s164
        %s166 = sand.u32 %s39, 1
        %s167 = smul.addr %s166, 16
        %s168 = scalar_lea.vmem [#allocation2], %s167
        %p169 = pneg %p52
        %p170 = pneg %p49
        %p171 = pneg %p80
        %p172 = pneg %p77
        %p173 = scmp.lt.s32.totalorder %s21, 1
        %s174 = scalar_select %p173, %s21, 1
        %p175 = scmp.lt.s32.totalorder %s22, 0
        %s176 = scalar_select %p175, %s22, 0
        %s177 = sadd.s32 %s176, %s174
        %s178 = smul.addr %s177, 8
        %s179 = scalar_lea.vmem %s1, %s178
        %p180 = pneg %p108
        %p181 = pneg %p105
        %p182 = scmp.lt.s32.totalorder %s21, 1
        %s183 = scalar_select %p182, %s21, 1
        %p184 = scmp.lt.s32.totalorder %s22, 0
        %s185 = scalar_select %p184, %s22, 0
        %s186 = sadd.s32 %s185, %s183
        %s187 = smul.addr %s186, 8
        %s188 = scalar_lea.vmem %s2, %s187
        %s189 = smul.u32 2, %s22
        %p190 = scmp.lt.s32.totalorder %s21, 1
        %s191 = scalar_select %p190, %s21, 1
        %p192 = scmp.lt.s32.totalorder %s22, 0
        %s193 = scalar_select %p192, %s22, 0
        %s194 = sadd.s32 %s193, %s191
        %s195 = smul.addr %s194, 8
        %s196 = scalar_lea.vmem %s1, %s195
        %p197 = scmp.lt.s32.totalorder %s21, 1
        %s198 = scalar_select %p197, %s21, 1
        %p199 = scmp.lt.s32.totalorder %s22, 0
        %s200 = scalar_select %p199, %s22, 0
        %s201 = sadd.s32 %s200, %s198
        %s202 = smul.addr %s201, 8
        %s203 = scalar_lea.vmem %s2, %s202
        %v204 = vld [vmem:[%s159] sm:$0xff]
        %v205 = vld [vmem:[%s159 + $0x8] sm:$0xff]
        %v206 = vadd.f32 %v204, %v205
        %207 = vadd.xlane.f32.xlu0 %v206
        %v208 = vpop.xlane.xlu0 %207
        %v209 = vmul.f32 %v204, %v204
        %v210 = vmul.f32 %v205, %v205
        %v211 = vadd.f32 %v209, %v210
        %212 = vadd.xlane.f32.xlu0 %v211
        %v213 = vpop.xlane.xlu0 %212
        %vm214 = vcmask 7168
        %215 = vst.msk [vmem:[%s196] sm:$0xff] %vm214, %v208
        %216 = vst.msk [vmem:[%s203] sm:$0xff] %vm214, %v213
        %p217 = scmp.lt.s32.totalorder %s21, 1
        %s218 = scalar_select %p217, %s21, 1
        %p219 = scmp.lt.s32.totalorder %s22, 0
        %s220 = scalar_select %p219, %s22, 0
        %s221 = sadd.s32 %s220, %s218
        %s222 = smul.addr %s221, 8
        %s223 = scalar_lea.vmem %s1, %s222
        %p224 = scmp.lt.s32.totalorder %s21, 1
        %s225 = scalar_select %p224, %s21, 1
        %p226 = scmp.lt.s32.totalorder %s22, 0
        %s227 = scalar_select %p226, %s22, 0
        %s228 = sadd.s32 %s227, %s225
        %s229 = smul.addr %s228, 8
        %s230 = scalar_lea.vmem %s2, %s229
        // Predicated region
        $region29: #{tpu_custom_call.1} parent=23 // pred_check
          %p231 = pneg %p77
        $region30: #{tpu_custom_call.1} parent=23 // pred_check_branch
          %233 = sbr.rel (%p231) target = $region32
        $region31: #{tpu_custom_call.1} parent=23 // pred_region
          _
        $region32: #{tpu_custom_call.1} parent=23 // pred_fallthru
          _
        // Predicated region
        $region33: #{tpu_custom_call.1} parent=23 // pred_check
          %p234 = pneg %p105
        $region34: #{tpu_custom_call.1} parent=23 // pred_check_branch
          %236 = sbr.rel (%p234) target = $region36
        $region35: #{tpu_custom_call.1} parent=23 // pred_region
          _
        $region36: #{tpu_custom_call.1} parent=23 // pred_fallthru
          _
      $region24: #{tpu_custom_call.1} parent=5 // pred_fallthru
        _
      %p237 = scmp.le.s32.totalorder 2, %s12
      // Predicated region
      $region37: #{tpu_custom_call.1} parent=5 // pred_check
        %p238 = pneg %p237
      $region38: #{tpu_custom_call.1} parent=5 // pred_check_branch
        %240 = sbr.rel (%p238) target = $region40
      $region39: #{tpu_custom_call.1} parent=5 // pred_region
        %s241 = ssub.s32 %s12, 2
        // Predicated region
        $region41: #{tpu_custom_call.1} parent=39 // pred_check
          %p242 = pneg %p83
        $region42: #{tpu_custom_call.1} parent=39 // pred_check_branch
          %244 = sbr.rel (%p242) target = $region44
        $region43: #{tpu_custom_call.1} parent=39 // pred_region
          %p245 = scmp.lt.s32.totalorder %s23, 1
          %s246 = scalar_select %p245, %s23, 1
          %p247 = scmp.lt.s32.totalorder %s24, 0
          %s248 = scalar_select %p247, %s24, 0
          %s249 = sadd.s32 %s248, %s246
          %s250 = smul.addr %s249, 8
          %s251 = scalar_lea.vmem %s1, %s250
        $region44: #{tpu_custom_call.1} parent=39 // pred_fallthru
          _
        // Predicated region
        $region45: #{tpu_custom_call.1} parent=39 // pred_check
          %p252 = pneg %p111
        $region46: #{tpu_custom_call.1} parent=39 // pred_check_branch
          %254 = sbr.rel (%p252) target = $region48
        $region47: #{tpu_custom_call.1} parent=39 // pred_region
          %p255 = scmp.lt.s32.totalorder %s23, 1
          %s256 = scalar_select %p255, %s23, 1
          %p257 = scmp.lt.s32.totalorder %s24, 0
          %s258 = scalar_select %p257, %s24, 0
          %s259 = sadd.s32 %s258, %s256
          %s260 = smul.addr %s259, 8
          %s261 = scalar_lea.vmem %s2, %s260
        $region48: #{tpu_custom_call.1} parent=39 // pred_fallthru
          _
      $region40: #{tpu_custom_call.1} parent=5 // pred_fallthru
        _
    $region6: #{tpu_custom_call.1} parent=1 // loop_footer
      %s16 = sadd.s32 1, %s12
    $region7: #{tpu_custom_call.1} parent=1 // loop_footer_branch
      %11 = sbr.rel target = $region3
    $region8: #{tpu_custom_call.1} parent=1 // loop_exit
      _
    %262 = vsyncpa [#allocation3], 1
    %s263 = scalar_lea.sflag [#allocation3], 1
    %264 = vsyncpa %s263, 1

</llo_original>
